<compile_context>
chip_gen: v7x
topology: tpu7x:2x2x1
jax: 0.10.0
libtpu: 0.0.40
codegen_flags: <defaults>
</compile_context>

<pallas_src>
import jax
import jax.numpy as jnp
from jax.experimental import pallas as pl
from jax.experimental.pallas import tpu as pltpu


def _make_layernorm_kernel(eps, n):
    inv_n = 1.0 / n
    inv_nm1 = 1.0 / (n - 1) if n > 1 else 1.0

    def kernel(x_ref, g_ref, b_ref, o_ref):
        x = x_ref[...].astype(jnp.float32)                  # (bB, R, L)
        # single-pass moments, per sample (axes 1,2)
        s1 = jnp.sum(x, axis=(1, 2), keepdims=True)          # (bB,1,1)
        s2 = jnp.sum(x * x, axis=(1, 2), keepdims=True)      # (bB,1,1)
        mean = s1 * inv_n
        var = jnp.maximum((s2 - s1 * mean) * inv_nm1, 0.0)   # unbiased, >= 0
        std = jnp.sqrt(var)
        inv = 1.0 / (std + eps)        # exact scalar divide (eps on std, per torch)
        # hoisted per-channel scale/shift; broadcast along lanes is cheap
        g = g_ref[...][None, :, :]                            # (1,R,Lg)
        b = b_ref[...][None, :, :]
        scale = g * inv                                       # (bB,R,Lg)
        shift = b - mean * scale                              # (bB,R,Lg)
        # single fused per-element sweep: mul + add, one store
        o_ref[...] = (x * scale + shift).astype(o_ref.dtype)

    return kernel


def _pick_batch_block(B, sample_bytes, target_bytes=2 * 1024 * 1024):
    """Largest divisor of B whose block stays <= target; keep >=2 grid steps
    when B >= 2 so the parallel batch axis can use both v7x TensorCores."""
    max_bb = B if B < 2 else max(1, B // 2)
    best = 1
    for bb in range(1, max_bb + 1):
        if B % bb == 0 and bb * sample_bytes <= target_bytes:
            best = bb
    return best


def layer_norm(x, gamma, beta, eps=1e-5):
    """x: (B, C, H, W); gamma, beta: (C,). Returns same shape/dtype as x."""
    B, C, H, W = x.shape
    HW = H * W
    n = C * HW
    out_dtype = x.dtype

    if HW % 128 == 0:
        # native layout is already lane-dense
        x2 = x.reshape(B, C, HW)
        g2 = gamma.reshape(C, 1).astype(jnp.float32)
        b2 = beta.reshape(C, 1).astype(jnp.float32)
        R, L = C, HW
    elif n % 128 == 0:
        # repack each sample to a single lane-dense row; pre-broadcast affine
        x2 = x.reshape(B, 1, n)
        g2 = jnp.broadcast_to(gamma.reshape(C, 1), (C, HW)).reshape(1, n)
        g2 = g2.astype(jnp.float32)
        b2 = jnp.broadcast_to(beta.reshape(C, 1), (C, HW)).reshape(1, n)
        b2 = b2.astype(jnp.float32)
        R, L = 1, n
    else:
        # TODO(synk): feature sizes not a multiple of 128 fall back to masked
        # (partial) stores; a padded lane-dense repack would be faster.
        x2 = x.reshape(B, C, HW)
        g2 = gamma.reshape(C, 1).astype(jnp.float32)
        b2 = beta.reshape(C, 1).astype(jnp.float32)
        R, L = C, HW

    sample_bytes = n * 4  # f32-resident per-sample block size
    bB = _pick_batch_block(B, sample_bytes)
    grid = (B // bB,)

    out = pl.pallas_call(
        _make_layernorm_kernel(eps, n),
        out_shape=jax.ShapeDtypeStruct((B, R, L), out_dtype),
        grid_spec=pltpu.PrefetchScalarGridSpec(
            num_scalar_prefetch=0,
            grid=grid,
            in_specs=[
                pl.BlockSpec((bB, R, L), lambda i: (i, 0, 0)),
                pl.BlockSpec(g2.shape, lambda i: (0, 0)),
                pl.BlockSpec(b2.shape, lambda i: (0, 0)),
            ],
            out_specs=pl.BlockSpec((bB, R, L), lambda i: (i, 0, 0)),
        ),
        compiler_params=pltpu.CompilerParams(
            dimension_semantics=("parallel",)),
    )(x2, g2, b2)
    return out.reshape(B, C, H, W)


# TODO(synk): the fp16 (torch.cuda.HalfTensor) branch normalizes over the
# whole tensor instead of per-sample; only the float (per-sample) path is
# implemented, matching fp16=False.

if __name__ == "__main__":
    key = jax.random.PRNGKey(0)
    kx, kg = jax.random.split(key)

    B, C, H, W = 2, 4, 16, 16
    x = jax.random.normal(kx, (B, C, H, W), dtype=jnp.float32)
    # gamma ~ uniform_() in [0, 1), beta = zeros (as in the module's init)
    gamma = jax.random.uniform(kg, (C,), dtype=jnp.float32)
    beta = jnp.zeros((C,), dtype=jnp.float32)

    out = layer_norm(x, gamma, beta, eps=1e-5)
    jax.block_until_ready(out)

    # pure-JAX reference (same semantics: unbiased std, eps added to std)
    xf = x.reshape(B, -1)
    mean = xf.mean(axis=1).reshape(B, 1, 1, 1)
    std = jnp.sqrt(((xf - xf.mean(axis=1, keepdims=True)) ** 2).sum(axis=1)
                   / (xf.shape[1] - 1)).reshape(B, 1, 1, 1)
    ref = (x - mean) / (std + 1e-5)
    ref = ref * gamma.reshape(1, C, 1, 1) + beta.reshape(1, C, 1, 1)
    assert jnp.allclose(out, ref, atol=1e-5, rtol=1e-5)

    print("KERNEL_OK")
</pallas_src>

<mosaic_0001>
module attributes {stable_mosaic.version = 11 : i64} {
  func.func @kernel(%arg0: i32, %arg1: memref<1x4x256xf32, #tpu.memory_space<vmem>>, %arg2: memref<4x1xf32, #tpu.memory_space<vmem>>, %arg3: memref<4x1xf32, #tpu.memory_space<vmem>>, %arg4: memref<1x4x256xf32, #tpu.memory_space<vmem>>) attributes {dimension_semantics = [#tpu.dimension_semantics<parallel>], iteration_bounds = array<i64: 2>, scalar_prefetch = 0 : i64, scratch_operands = 0 : i64, tpu.core_type = #tpu.core_type<tc>, window_params = [{transform_indices = @transform_0, window_bounds = array<i64: 1, 4, 256>}, {pipeline_mode = #tpu.pipeline_mode<synchronous>, transform_indices = @transform_1, window_bounds = array<i64: 4, 1>}, {pipeline_mode = #tpu.pipeline_mode<synchronous>, transform_indices = @transform_2, window_bounds = array<i64: 4, 1>}, {transform_indices = @transform_3, window_bounds = array<i64: 1, 4, 256>}]} {
    %c0 = arith.constant 0 : index
    %c0_0 = arith.constant 0 : index
    %c0_1 = arith.constant 0 : index
    %0 = vector.load %arg1[%c0, %c0_0, %c0_1] : memref<1x4x256xf32, #tpu.memory_space<vmem>>, vector<1x4x256xf32>
    %cst = arith.constant dense<0.000000e+00> : vector<1xf32>
    %1 = vector.multi_reduction <add>, %0, %cst [1, 2] : vector<1x4x256xf32> to vector<1xf32>
    %2 = vector.shape_cast %1 : vector<1xf32> to vector<1x1x1xf32>
    %3 = arith.mulf %0, %0 : vector<1x4x256xf32>
    %cst_2 = arith.constant dense<0.000000e+00> : vector<1xf32>
    %4 = vector.multi_reduction <add>, %3, %cst_2 [1, 2] : vector<1x4x256xf32> to vector<1xf32>
    %5 = vector.shape_cast %4 : vector<1xf32> to vector<1x1x1xf32>
    %cst_3 = arith.constant 9.765625E-4 : f32
    %6 = vector.broadcast %cst_3 : f32 to vector<1x1x1xf32>
    %7 = arith.mulf %2, %6 : vector<1x1x1xf32>
    %8 = arith.mulf %2, %7 : vector<1x1x1xf32>
    %9 = arith.subf %5, %8 : vector<1x1x1xf32>
    %cst_4 = arith.constant 9.77517105E-4 : f32
    %10 = vector.broadcast %cst_4 : f32 to vector<1x1x1xf32>
    %11 = arith.mulf %9, %10 : vector<1x1x1xf32>
    %cst_5 = arith.constant 0.000000e+00 : f32
    %12 = vector.broadcast %cst_5 : f32 to vector<1x1x1xf32>
    %13 = arith.maximumf %11, %12 : vector<1x1x1xf32>
    %14 = math.sqrt %13 : vector<1x1x1xf32>
    %cst_6 = arith.constant 9.99999974E-6 : f32
    %15 = vector.broadcast %cst_6 : f32 to vector<1x1x1xf32>
    %16 = arith.addf %14, %15 : vector<1x1x1xf32>
    %cst_7 = arith.constant 1.000000e+00 : f32
    %17 = vector.broadcast %cst_7 : f32 to vector<1x1x1xf32>
    %18 = arith.divf %17, %16 : vector<1x1x1xf32>
    %c0_8 = arith.constant 0 : index
    %c0_9 = arith.constant 0 : index
    %19 = vector.load %arg2[%c0_8, %c0_9] : memref<4x1xf32, #tpu.memory_space<vmem>>, vector<4x1xf32>
    %20 = vector.shape_cast %19 : vector<4x1xf32> to vector<1x4x1xf32>
    %c0_10 = arith.constant 0 : index
    %c0_11 = arith.constant 0 : index
    %21 = vector.load %arg3[%c0_10, %c0_11] : memref<4x1xf32, #tpu.memory_space<vmem>>, vector<4x1xf32>
    %22 = vector.shape_cast %21 : vector<4x1xf32> to vector<1x4x1xf32>
    %23 = vector.broadcast %18 : vector<1x1x1xf32> to vector<1x4x1xf32>
    %24 = arith.mulf %20, %23 : vector<1x4x1xf32>
    %25 = vector.broadcast %7 : vector<1x1x1xf32> to vector<1x4x1xf32>
    %26 = arith.mulf %25, %24 : vector<1x4x1xf32>
    %27 = arith.subf %22, %26 : vector<1x4x1xf32>
    %28 = vector.broadcast %24 : vector<1x4x1xf32> to vector<1x4x256xf32>
    %29 = arith.mulf %0, %28 : vector<1x4x256xf32>
    %30 = vector.broadcast %27 : vector<1x4x1xf32> to vector<1x4x256xf32>
    %31 = arith.addf %29, %30 : vector<1x4x256xf32>
    %c0_12 = arith.constant 0 : index
    %c0_13 = arith.constant 0 : index
    %c0_14 = arith.constant 0 : index
    %32 = vector.load %arg4[%c0_12, %c0_13, %c0_14] : memref<1x4x256xf32, #tpu.memory_space<vmem>>, vector<1x4x256xf32>
    tpu.vector_store %arg4[%c0_12, %c0_13, %c0_14], %31 {strides = array<i32>} : memref<1x4x256xf32, #tpu.memory_space<vmem>>, vector<1x4x256xf32>,
    return
  }
  func.func @transform_0(%arg0: i32) -> (i32, i32, i32) {
    %c0_i32 = arith.constant 0 : i32
    %c0_i32_0 = arith.constant 0 : i32
    %c0_i32_1 = arith.constant 0 : i32
    return %arg0, %c0_i32, %c0_i32_0 : i32, i32, i32
  }
  func.func @transform_1(%arg0: i32) -> (i32, i32) {
    %c0_i32 = arith.constant 0 : i32
    %c0_i32_0 = arith.constant 0 : i32
    %c0_i32_1 = arith.constant 0 : i32
    return %c0_i32, %c0_i32_0 : i32, i32
  }
  func.func @transform_2(%arg0: i32) -> (i32, i32) {
    %c0_i32 = arith.constant 0 : i32
    %c0_i32_0 = arith.constant 0 : i32
    %c0_i32_1 = arith.constant 0 : i32
    return %c0_i32, %c0_i32_0 : i32, i32
  }
  func.func @transform_3(%arg0: i32) -> (i32, i32, i32) {
    %c0_i32 = arith.constant 0 : i32
    %c0_i32_0 = arith.constant 0 : i32
    %c0_i32_1 = arith.constant 0 : i32
    return %arg0, %c0_i32, %c0_i32_0 : i32, i32, i32
  }
}

</mosaic_0001>

<llo_original>
// kernel: tpu_custom_call.1
$region0: #{tpu_custom_call.1}
  #allocation0 [shape = 'u32[]', space=smem, size = 0x4, offset = 0x4, fixed_abs, tag = 'smem constant byte address 0x4 - core index']
  #allocation1 [shape = 'u32[144,128]{1,0:T(1,128)}', space=vmem, size = 0x12000, scoped, tag = 'internal scratch']
  %s0 = inlined_call_operand.hbm [shape: f32[2,4,256], index: 0, kind: input, shape index: {}]
  %s1 = inlined_call_operand.vmem [shape: f32[4,1], index: 1, kind: input, shape index: {}]
  %s2 = inlined_call_operand.vmem [shape: f32[4,1], index: 2, kind: input, shape index: {}]
  %s3 = inlined_call_operand.hbm [shape: f32[2,4,256], index: 3, kind: output, shape index: {}]
  %s4 = sld [smem:[#allocation0]]
  $region49: #{tpu_custom_call.1} parent=0
    _
  %s6 = ssub.s32 1, %s4
  %s7 = scalar_select 0, %s6, %s4
  $region1: #{tpu_custom_call.1} parent=0
    #allocation2 [shape = 'u8[8192]{0}', space=vmem, size = 0x2000, scoped, tag = 'input window, operand 0']
    #allocation3 [shape = 's32[2]{0}', space=sflag, size = 0x8, scoped, tag = 'scoped memory for tpu_custom_call.1']
    #allocation4 [shape = 's32[2]{0}', space=sflag, size = 0x8, scoped, tag = 'scoped memory for tpu_custom_call.1']
    #allocation5 [shape = 'u8[8192]{0}', space=vmem, size = 0x2000, scoped, tag = 'output window, operand 0']
    %8 = vsyncpa [#allocation3], 0
    %s9 = scalar_lea.sflag [#allocation3], 1
    %10 = vsyncpa %s9, 0
    %11 = vsyncpa [#allocation4], 0
    %s12 = scalar_lea.sflag [#allocation4], 1
    %13 = vsyncpa %s12, 0
    loop: start=0, step=1, limit=4
    $region2: #{tpu_custom_call.1} parent=1 // loop_pre_header
      _
    $region3: #{tpu_custom_call.1} parent=1 // loop_header
      %s15 = sphi 0, %s19
      %p16 = scmp.ge.s32.totalorder %s15, 4
      %s25 = sphi 0, %s27
      %s28 = sphi 0, %s25
      %s29 = sphi 0, %s28
      %s45 = sphi 0, %s29
      %s49 = sphi 0, %s49
      %s51 = sphi 0, %s49
      %s52 = sphi 0, %s51
      %s66 = sphi 0, %s52
      %s70 = sphi 0, %s70
      %s72 = sphi 0, %s70
      %s73 = sphi 0, %s72
      %s87 = sphi 0, %s73
      %s93 = sphi 0, %s95
      %s96 = sphi 0, %s93
      %s97 = sphi 0, %s96
      %s113 = sphi 0, %s97
    $region4: #{tpu_custom_call.1} parent=1 // loop_header_branch
      %18 = sbr.rel (%p16) target = $region8
    $region5: #{tpu_custom_call.1} parent=1 // loop_body
      %s20 = ssub.s32 %s15, 1
      %s21 = ssub.s32 %s15, 2
      %s22 = sadd.s32 %s15, 1
      %s23 = ssub.s32 %s15, %s22
      %p24 = scmp.eq.s32.totalorder %s23, 0
      %s26 = sadd.s32 %s25, 1
      %s27 = scalar_select %p24, %s25, %s26
      %p30 = pneg %p24
      %p31 = scmp.eq.s32.totalorder %s15, 1
      %p32 = por %p30, %p31
      %p33 = scmp.ne.s32.totalorder %s25, %s28
      %p34 = scmp.eq.s32.totalorder %s15, 0
      %p35 = por %p33, %p34
      %p36 = scmp.ne.s32.totalorder %s25, %s28
      %p37 = scmp.eq.s32.totalorder %s20, 1
      %p38 = por %p36, %p37
      %p39 = scmp.ne.s32.totalorder %s28, %s29
      %p40 = scmp.eq.s32.totalorder %s20, 0
      %p41 = por %p39, %p40
      %p42 = scmp.ne.s32.totalorder %s28, %s29
      %p43 = scmp.eq.s32.totalorder %s21, 1
      %p44 = por %p42, %p43
      %p46 = scmp.ne.s32.totalorder %s29, %s45
      %p47 = scmp.eq.s32.totalorder %s21, 0
      %p48 = por %p46, %p47
      %s50 = sadd.s32 %s49, 1
      %p53 = scmp.eq.s32.totalorder %s15, 1
      %p54 = scmp.ne.s32.totalorder %s49, %s51
      %p55 = scmp.eq.s32.totalorder %s15, 0
      %p56 = por %p54, %p55
      %p57 = scmp.ne.s32.totalorder %s49, %s51
      %p58 = scmp.eq.s32.totalorder %s20, 1
      %p59 = por %p57, %p58
      %p60 = scmp.ne.s32.totalorder %s51, %s52
      %p61 = scmp.eq.s32.totalorder %s20, 0
      %p62 = por %p60, %p61
      %p63 = scmp.ne.s32.totalorder %s51, %s52
      %p64 = scmp.eq.s32.totalorder %s21, 1
      %p65 = por %p63, %p64
      %p67 = scmp.ne.s32.totalorder %s52, %s66
      %p68 = scmp.eq.s32.totalorder %s21, 0
      %p69 = por %p67, %p68
      %s71 = sadd.s32 %s70, 1
      %p74 = scmp.eq.s32.totalorder %s15, 1
      %p75 = scmp.ne.s32.totalorder %s70, %s72
      %p76 = scmp.eq.s32.totalorder %s15, 0
      %p77 = por %p75, %p76
      %p78 = scmp.ne.s32.totalorder %s70, %s72
      %p79 = scmp.eq.s32.totalorder %s20, 1
      %p80 = por %p78, %p79
      %p81 = scmp.ne.s32.totalorder %s72, %s73
      %p82 = scmp.eq.s32.totalorder %s20, 0
      %p83 = por %p81, %p82
      %p84 = scmp.ne.s32.totalorder %s72, %s73
      %p85 = scmp.eq.s32.totalorder %s21, 1
      %p86 = por %p84, %p85
      %p88 = scmp.ne.s32.totalorder %s73, %s87
      %p89 = scmp.eq.s32.totalorder %s21, 0
      %p90 = por %p88, %p89
      %s91 = ssub.s32 %s15, %s22
      %p92 = scmp.eq.s32.totalorder %s91, 0
      %s94 = sadd.s32 %s93, 1
      %s95 = scalar_select %p92, %s93, %s94
      %p98 = pneg %p92
      %p99 = scmp.eq.s32.totalorder %s15, 1
      %p100 = por %p98, %p99
      %p101 = scmp.ne.s32.totalorder %s93, %s96
      %p102 = scmp.eq.s32.totalorder %s15, 0
      %p103 = por %p101, %p102
      %p104 = scmp.ne.s32.totalorder %s93, %s96
      %p105 = scmp.eq.s32.totalorder %s20, 1
      %p106 = por %p104, %p105
      %p107 = scmp.ne.s32.totalorder %s96, %s97
      %p108 = scmp.eq.s32.totalorder %s20, 0
      %p109 = por %p107, %p108
      %p110 = scmp.ne.s32.totalorder %s96, %s97
      %p111 = scmp.eq.s32.totalorder %s21, 1
      %p112 = por %p110, %p111
      %p114 = scmp.ne.s32.totalorder %s97, %s113
      %p115 = scmp.eq.s32.totalorder %s21, 0
      %p116 = por %p114, %p115
      %p117 = scmp.le.s32.totalorder 1, %s15
      %p118 = scmp.lt.s32.totalorder %s15, 3
      %p119 = pnand %p117, %p118
      %p120 = pneg %p119
      // Predicated region
      $region9: #{tpu_custom_call.1} parent=5 // pred_check
        _
      $region10: #{tpu_custom_call.1} parent=5 // pred_check_branch
        %122 = sbr.rel (%p119) target = $region12
      $region11: #{tpu_custom_call.1} parent=5 // pred_region
        %s123 = ssub.s32 %s15, 1
        // Predicated region
        $region13: #{tpu_custom_call.1} parent=11 // pred_check
          %p124 = pneg %p62
        $region14: #{tpu_custom_call.1} parent=11 // pred_check_branch
          %126 = sbr.rel (%p124) target = $region16
        $region15: #{tpu_custom_call.1} parent=11 // pred_region
          _
        $region16: #{tpu_custom_call.1} parent=11 // pred_fallthru
          _
        // Predicated region
        $region17: #{tpu_custom_call.1} parent=11 // pred_check
          %p127 = pneg %p83
        $region18: #{tpu_custom_call.1} parent=11 // pred_check_branch
          %129 = sbr.rel (%p127) target = $region20
        $region19: #{tpu_custom_call.1} parent=11 // pred_region
          _
        $region20: #{tpu_custom_call.1} parent=11 // pred_fallthru
          _
      $region12: #{tpu_custom_call.1} parent=5 // pred_fallthru
        _
      %p130 = scmp.lt.s32.totalorder %s15, 2
      // Predicated region
      $region21: #{tpu_custom_call.1} parent=5 // pred_check
        %p131 = pneg %p130
      $region22: #{tpu_custom_call.1} parent=5 // pred_check_branch
        %133 = sbr.rel (%p131) target = $region24
      $region23: #{tpu_custom_call.1} parent=5 // pred_region
        // Predicated region
        $region25: #{tpu_custom_call.1} parent=23 // pred_check
          %p134 = pneg %p35
        $region26: #{tpu_custom_call.1} parent=23 // pred_check_branch
          %136 = sbr.rel (%p134) target = $region28
        $region27: #{tpu_custom_call.1} parent=23 // pred_region
          %s137 = sand.u32 %s25, 1
          %s138 = scalar_lea.sflag [#allocation3], %s137
          %s139 = sand.u32 %s25, 1
          %s140 = smul.addr %s139, 8
          %s141 = scalar_lea.vmem [#allocation2], %s140
          %s143 = ssub.s32 128, 128
          %144 = vsyncadd %s138, %s143
          %s145 = smul.addr %s15, 2
          %s146 = smul.addr %s145, 64
          %s147 = scalar_lea.hbm %s0, %s146
          %s149 = sshll.u32 %s141, 4
          %s150 = int_to_ptr.vmem [resolvable:$true] %s149
          %152 = dma.hbm_to_vmem [thread:$0]  %s147, 128, %s150, %s138
        $region28: #{tpu_custom_call.1} parent=23 // pred_fallthru
          _
      $region24: #{tpu_custom_call.1} parent=5 // pred_fallthru
        _
      %p153 = scmp.le.s32.totalorder 1, %s15
      %p154 = scmp.lt.s32.totalorder %s15, 3
      %p155 = pnand %p153, %p154
      %p156 = pneg %p155
      // Predicated region
      $region29: #{tpu_custom_call.1} parent=5 // pred_check
        _
      $region30: #{tpu_custom_call.1} parent=5 // pred_check_branch
        %158 = sbr.rel (%p155) target = $region32
      $region31: #{tpu_custom_call.1} parent=5 // pred_region
        %s159 = ssub.s32 %s15, 1
        %s160 = sand.u32 %s28, 1
        %s161 = scalar_lea.sflag [#allocation3], %s160
        %s162 = sand.u32 %s28, 1
        %s163 = smul.addr %s162, 8
        %s164 = scalar_lea.vmem [#allocation2], %s163
        // Predicated region
        $region33: #{tpu_custom_call.1} parent=31 // pred_check
          %p165 = pneg %p41
        $region34: #{tpu_custom_call.1} parent=31 // pred_check_branch
          %167 = sbr.rel (%p165) target = $region36
        $region35: #{tpu_custom_call.1} parent=31 // pred_region
          %168 = dma.done %s161, 128
        $region36: #{tpu_custom_call.1} parent=31 // pred_fallthru
          _
        %s169 = sand.u32 %s28, 1
        %s170 = scalar_lea.sflag [#allocation3], %s169
        %s171 = sand.u32 %s28, 1
        %s172 = smul.addr %s171, 8
        %s173 = scalar_lea.vmem [#allocation2], %s172
        %p174 = pneg %p41
        %p175 = pneg %p38
        %p176 = pneg %p62
        %p177 = pneg %p59
        %p178 = pneg %p83
        %p179 = pneg %p80
        %p180 = pneg %p109
        %p181 = pneg %p106
        %s182 = sand.u32 %s96, 1
        %s183 = scalar_lea.sflag [#allocation4], %s182
        %s184 = sand.u32 %s96, 1
        %s185 = smul.addr %s184, 8
        %s186 = scalar_lea.vmem [#allocation5], %s185
        %v187 = vld [vmem:[%s164] sm:$0xff]
        %v189 = vcombine.high %v187, %v187
        %vm191 = vcmask 1043456
        %v192 = vsel %vm191, %v187, 0.0
        %v193 = vsel %vm191, %v189, 0.0
        %v194 = vadd.f32 %v192, %v193
        %195 = vadd.xlane.f32.xlu0 %v194
        %v196 = vpop.xlane.xlu0 %195
        %v197 = vrot.slane %v196, 4
        %v198 = vadd.f32 %v196, %v197
        %v199 = vrot.slane %v198, 2
        %v200 = vadd.f32 %v198, %v199
        %v201 = vrot.slane %v200, 1
        %v202 = vadd.f32 %v200, %v201
        %v203 = vmul.f32 %v187, %v187
        %v205 = vcombine.high %v203, %v203
        %v207 = vsel %vm191, %v203, 0.0
        %v208 = vsel %vm191, %v205, 0.0
        %v209 = vadd.f32 %v207, %v208
        %210 = vadd.xlane.f32.xlu0 %v209
        %v211 = vpop.xlane.xlu0 %210
        %v212 = vrot.slane %v211, 4
        %v213 = vadd.f32 %v211, %v212
        %v214 = vrot.slane %v213, 2
        %v215 = vadd.f32 %v213, %v214
        %v216 = vrot.slane %v215, 1
        %v217 = vadd.f32 %v215, %v216
        %v218 = vmul.f32 %v202, 0.0009765625
        %v219 = vmul.f32 %v202, %v218
        %v220 = vsub.f32 %v217, %v219
        %v221 = vmul.f32 %v220, 0.0009775171
        %v222 = vmax.f32 %v221, 0.0
        %v223 = vrsqrt.pop %v222
        %v224 = vmul.f32 %v222, %v223
        %vm225 = vcmp.eq.f32.partialorder %v222, inf
        %v226 = vsel %vm225, %v222, %v224
        %vm227 = vcmp.eq.f32.partialorder %v222, 0.0
        %v228 = vand.u32 %v222, 2147483648
        %v229 = vsel %vm227, %v228, %v226
        %v230 = vadd.f32 %v229, 1e-05
        %v231 = vrcp.pop %v230
        %v232 = vmul.f32 1.0, %v231
        %v233 = vld [vmem:[%s1] sm:$0xf]
        %v234 = vld [vmem:[%s2] sm:$0xf]
        %v235 = vmul.f32 %v233, %v232
        %v236 = vmul.f32 %v218, %v235
        %v237 = vsub.f32 %v234, %v236
        %239 = vset.pattern.permute.xlu0 0
        %240 = vperm.xlu0 %239, %v235
        %v241 = vpop.permute.xlu0 %240
        %v243 = vunpack.c.l.s4 839922192
        %v244 = vunpack.c.0.s8 %v243
        %v245 = vlaneseq
        %v246 = vshrl.u32 %v245, 7
        %v247 = vsub.s32 %v244, %v246
        %v248 = vrot.slane %v241, %v247
        %v250 = vmul.f32 %v187, %v248
        %252 = vset.pattern.permute.xlu0 0
        %253 = vperm.xlu0 %252, %v237
        %v254 = vpop.permute.xlu0 %253
        %v256 = vunpack.c.l.s4 839922192
        %v257 = vunpack.c.0.s8 %v256
        %v258 = vlaneseq
        %v259 = vshrl.u32 %v258, 7
        %v260 = vsub.s32 %v257, %v259
        %v261 = vrot.slane %v254, %v260
        %v263 = vadd.f32 %v250, %v261
        %264 = vst [vmem:[%s186] sm:$0xff] %v263
        %s265 = sand.u32 %s96, 1
        %s266 = scalar_lea.sflag [#allocation4], %s265
        %s267 = sand.u32 %s96, 1
        %s268 = smul.addr %s267, 8
        %s269 = scalar_lea.vmem [#allocation5], %s268
        // Predicated region
        $region37: #{tpu_custom_call.1} parent=31 // pred_check
          %p270 = pneg %p106
        $region38: #{tpu_custom_call.1} parent=31 // pred_check_branch
          %272 = sbr.rel (%p270) target = $region40
        $region39: #{tpu_custom_call.1} parent=31 // pred_region
          %s274 = ssub.s32 128, 128
          %275 = vsyncadd %s266, %s274
          %s276 = smul.addr %s20, 2
          %s277 = smul.addr %s276, 64
          %s278 = scalar_lea.hbm %s3, %s277
          %s280 = sshll.u32 %s269, 4
          %s281 = int_to_ptr.vmem [resolvable:$true] %s280
          %283 = dma.vmem_to_hbm [thread:$0]  %s281, 128, %s278, %s266
        $region40: #{tpu_custom_call.1} parent=31 // pred_fallthru
          _
      $region32: #{tpu_custom_call.1} parent=5 // pred_fallthru
        _
      %p284 = scmp.le.s32.totalorder 2, %s15
      // Predicated region
      $region41: #{tpu_custom_call.1} parent=5 // pred_check
        %p285 = pneg %p284
      $region42: #{tpu_custom_call.1} parent=5 // pred_check_branch
        %287 = sbr.rel (%p285) target = $region44
      $region43: #{tpu_custom_call.1} parent=5 // pred_region
        %s288 = ssub.s32 %s15, 2
        // Predicated region
        $region45: #{tpu_custom_call.1} parent=43 // pred_check
          %p289 = pneg %p112
        $region46: #{tpu_custom_call.1} parent=43 // pred_check_branch
          %291 = sbr.rel (%p289) target = $region48
        $region47: #{tpu_custom_call.1} parent=43 // pred_region
          %s292 = sand.u32 %s97, 1
          %s293 = scalar_lea.sflag [#allocation4], %s292
          %s294 = sand.u32 %s97, 1
          %s295 = smul.addr %s294, 8
          %s296 = scalar_lea.vmem [#allocation5], %s295
          %297 = dma.done %s293, 128
        $region48: #{tpu_custom_call.1} parent=43 // pred_fallthru
          _
      $region44: #{tpu_custom_call.1} parent=5 // pred_fallthru
        _
    $region6: #{tpu_custom_call.1} parent=1 // loop_footer
      %s19 = sadd.s32 1, %s15
    $region7: #{tpu_custom_call.1} parent=1 // loop_footer_branch
      %14 = sbr.rel target = $region3
    $region8: #{tpu_custom_call.1} parent=1 // loop_exit
      _
    %298 = vsyncpa [#allocation3], 1
    %s299 = scalar_lea.sflag [#allocation3], 1
    %300 = vsyncpa %s299, 1
    %301 = vsyncpa [#allocation4], 1
    %s302 = scalar_lea.sflag [#allocation4], 1
    %303 = vsyncpa %s302, 1

</llo_original>
